<compile_context>
chip_gen: v6e
topology: v6e:2x2x1
jax: 0.10.0
libtpu: 0.0.40
codegen_flags: <defaults>
</compile_context>

<pallas_src>
import math

import jax
import jax.numpy as jnp
from jax.experimental import pallas as pl
from jax.experimental.pallas import tpu as pltpu


def _packed_affine_kernel(x_ref, w_ref, b_ref, o_ref):
    # One lane-dense MXU matmul per grid step:
    #   (rows, 4*G) @ (4*G, G*O) + (1, G*O)
    x = x_ref[...].astype(jnp.float32)          # upcast narrow dtypes after DMA
    y = jnp.dot(x, w_ref[...], preferred_element_type=jnp.float32)
    o_ref[...] = (y + b_ref[...]).astype(o_ref.dtype)


def _round_up(n, m):
    return ((n + m - 1) // m) * m


def simple_network(inputs, w1_t, b1, w2_t, b2, *, rows_per_block=None):
    """Forward of SimpleNetwork: x.view(-1,4) -> Linear(4,4) -> Linear(4,O).

    inputs: any shape whose element count is divisible by 4.
    w1_t: (4, 4), b1: (1, 4), w2_t: (4, O), b2: (1, O).
    Returns (B, O) float32, matching the PyTorch forward.
    """
    x = inputs.reshape(-1, 4)
    B = x.shape[0]
    O = w2_t.shape[1]
    f32 = jnp.float32

    # Exact fold of Linear1 o Linear2 (no nonlinearity between layers).
    w = jnp.dot(w1_t.astype(f32), w2_t.astype(f32), preferred_element_type=f32)  # (4, O)
    b = (jnp.dot(b1.astype(f32), w2_t.astype(f32), preferred_element_type=f32)
         + b2.astype(f32)).reshape(1, O)                                          # (1, O)

    # Packing factor: smallest G with 4*G % 128 == 0 and G*O % 128 == 0
    # (lane-dense input AND output -> unmasked full-lane loads/stores).
    G = math.lcm(32, 128 // math.gcd(O, 128))

    Bp = _round_up(B, G)
    if Bp != B:
        # Extra HBM pass; supply B % G == 0 to make the packed reshape free.
        x = jnp.pad(x, ((0, Bp - B), (0, 0)))
    R = Bp // G
    xp = x.reshape(R, 4 * G)                      # free row-major view

    # Block-diagonal packed weight / tiled bias:
    #   Wp[4*j + k, O*j + o] = w[k, o],   bp[0, O*j + o] = b[0, o]
    wp = jnp.einsum("ij,ko->ikjo", jnp.eye(G, dtype=f32), w).reshape(4 * G, G * O)
    bp = jnp.tile(b, (1, G))                      # (1, G*O)

    # Size the packed-row tile so each grid step streams ~4 MiB (input+output),
    # amortizing per-step pipeline overhead; double-buffered working set stays
    # well under the 32 MiB scoped-VMEM default (safe on v7x's 64 MiB VMEM).
    if rows_per_block is None:
        per_row_bytes = 4 * G * x.dtype.itemsize + G * O * 4   # in + f32 out
        rows_per_block = max(8, (4 * 1024 * 1024 // per_row_bytes) // 8 * 8)
    if rows_per_block >= R:
        rows_per_block = R                        # single full-extent block
    else:
        rows_per_block = max(8, (rows_per_block // 8) * 8)

    grid = (pl.cdiv(R, rows_per_block),)          # ragged last block is fine:
                                                  # rows are independent, OOB
                                                  # writes are dropped.

    out_packed = pl.pallas_call(
        _packed_affine_kernel,
        out_shape=jax.ShapeDtypeStruct((R, G * O), f32),
        grid=grid,
        in_specs=[
            pl.BlockSpec((rows_per_block, 4 * G), lambda i: (i, 0)),   # streamed
            pl.BlockSpec((4 * G, G * O), lambda i: (0, 0)),            # resident
            pl.BlockSpec((1, G * O), lambda i: (0, 0)),                # resident
        ],
        out_specs=pl.BlockSpec((rows_per_block, G * O), lambda i: (i, 0)),
        compiler_params=pltpu.CompilerParams(
            # Portable across v5e/v6e/v7x; on v7x, pltpu.CORE_PARALLEL on this
            # axis can explicitly shard the batch grid over both TensorCores.
            dimension_semantics=("parallel",),
            vmem_limit_bytes=32 * 1024 * 1024,
        ),
    )(xp, wp, bp)

    out = out_packed.reshape(Bp, O)               # free view back to (Bp, O)
    return out[:B] if Bp != B else out


def init_params(key, num_inputs, num_outputs):
    """Deterministic init mimicking torch.nn.Linear (uniform +-1/sqrt(fan_in)).
    Returns weights already transposed to (in, out), biases as (1, out)."""
    k1, k2, k3, k4 = jax.random.split(key, 4)
    bound1 = 1.0 / jnp.sqrt(jnp.float32(num_inputs))
    w1 = jax.random.uniform(k1, (4, num_inputs), jnp.float32, -bound1, bound1)
    b1 = jax.random.uniform(k2, (4,), jnp.float32, -bound1, bound1)
    bound2 = 1.0 / jnp.sqrt(jnp.float32(4))
    w2 = jax.random.uniform(k3, (num_outputs, 4), jnp.float32, -bound2, bound2)
    b2 = jax.random.uniform(k4, (num_outputs,), jnp.float32, -bound2, bound2)
    return w1.T, b1.reshape(1, 4), w2.T, b2.reshape(1, num_outputs)


if __name__ == "__main__":
    num_inputs = 4   # forward does .view(-1, 4), so num_inputs must be 4
    num_outputs = 6
    key = jax.random.PRNGKey(0)
    kp, kx1, kx2, kx3, kx4 = jax.random.split(key, 5)

    w1_t, b1, w2_t, b2 = init_params(kp, num_inputs, num_outputs)

    def reference(inp):
        xr = inp.reshape(-1, 4).astype(jnp.float32)
        return (xr @ w1_t + b1) @ w2_t + b2   # original two-layer (unfolded) math

    # 1) tiny example like the torch forward: (2, 2, 4) -> view(-1, 4) -> (4, 4)
    inputs = jax.random.normal(kx1, (2, 2, 4), jnp.float32)
    out = jax.block_until_ready(simple_network(inputs, w1_t, b1, w2_t, b2))
    assert out.shape == (4, num_outputs)
    assert jnp.allclose(out, reference(inputs), atol=1e-4), "mismatch (small)"

    # 2) B multiple of G (no pad path), forced multi-step grid with ragged tail:
    #    B=1280, G=64 -> R=20 packed rows, rows_per_block=8 -> grid=(3,)
    inputs2 = jax.random.normal(kx2, (1280, 4), jnp.float32)
    out2 = jax.block_until_ready(
        simple_network(inputs2, w1_t, b1, w2_t, b2, rows_per_block=8))
    assert out2.shape == (1280, num_outputs)
    assert jnp.allclose(out2, reference(inputs2), atol=1e-4), "mismatch (tiled)"

    # 3) B not a multiple of G -> minimal pad to G, sliced off after the call
    inputs3 = jax.random.normal(kx3, (1000, 4), jnp.float32)
    out3 = jax.block_until_ready(simple_network(inputs3, w1_t, b1, w2_t, b2))
    assert out3.shape == (1000, num_outputs)
    assert jnp.allclose(out3, reference(inputs3), atol=1e-4), "mismatch (padded)"

    # 4) narrow-dtype input: DMA'd as bf16, upcast inside the kernel
    inputs4 = jax.random.normal(kx4, (128, 4), jnp.float32).astype(jnp.bfloat16)
    out4 = jax.block_until_ready(simple_network(inputs4, w1_t, b1, w2_t, b2))
    assert out4.shape == (128, num_outputs)
    assert jnp.allclose(out4, reference(inputs4), atol=1e-4), "mismatch (bf16)"

    print("KERNEL_OK")
</pallas_src>

<mosaic_0001>
module attributes {stable_mosaic.version = 11 : i64} {
  func.func @_packed_affine_kernel(%arg0: i32, %arg1: memref<1x256xf32, #tpu.memory_space<vmem>>, %arg2: memref<256x384xf32, #tpu.memory_space<vmem>>, %arg3: memref<1x384xf32, #tpu.memory_space<vmem>>, %arg4: memref<1x384xf32, #tpu.memory_space<vmem>>) attributes {dimension_semantics = [#tpu.dimension_semantics<parallel>], iteration_bounds = array<i64: 1>, scalar_prefetch = 0 : i64, scratch_operands = 0 : i64, tpu.core_type = #tpu.core_type<tc>, window_params = [{transform_indices = @transform_0, window_bounds = array<i64: 1, 256>}, {pipeline_mode = #tpu.pipeline_mode<synchronous>, transform_indices = @transform_1, window_bounds = array<i64: 256, 384>}, {pipeline_mode = #tpu.pipeline_mode<synchronous>, transform_indices = @transform_2, window_bounds = array<i64: 1, 384>}, {transform_indices = @transform_3, window_bounds = array<i64: 1, 384>}]} {
    %c0 = arith.constant 0 : index
    %c0_0 = arith.constant 0 : index
    %0 = vector.load %arg1[%c0, %c0_0] : memref<1x256xf32, #tpu.memory_space<vmem>>, vector<1x256xf32>
    %c0_1 = arith.constant 0 : index
    %c0_2 = arith.constant 0 : index
    %1 = vector.load %arg2[%c0_1, %c0_2] : memref<256x384xf32, #tpu.memory_space<vmem>>, vector<256x384xf32>
    %cst = arith.constant dense<0.000000e+00> : vector<1x384xf32>
    %2 = tpu.matmul %0, %1, %cst {dimension_numbers = #tpu.dot_dimension_numbers<[1], [0], [0], [1], [0, 0, 1, 1], [], []>} : vector<1x256xf32>, vector<256x384xf32>, vector<1x384xf32> -> vector<1x384xf32>
    %c0_3 = arith.constant 0 : index
    %c0_4 = arith.constant 0 : index
    %3 = vector.load %arg3[%c0_3, %c0_4] : memref<1x384xf32, #tpu.memory_space<vmem>>, vector<1x384xf32>
    %4 = arith.addf %2, %3 : vector<1x384xf32>
    %c0_5 = arith.constant 0 : index
    %c0_6 = arith.constant 0 : index
    %5 = vector.load %arg4[%c0_5, %c0_6] : memref<1x384xf32, #tpu.memory_space<vmem>>, vector<1x384xf32>
    tpu.vector_store %arg4[%c0_5, %c0_6], %4 {strides = array<i32>} : memref<1x384xf32, #tpu.memory_space<vmem>>, vector<1x384xf32>,
    return
  }
  func.func @transform_0(%arg0: i32) -> (i32, i32) {
    %c0_i32 = arith.constant 0 : i32
    %c0_i32_0 = arith.constant 0 : i32
    return %arg0, %c0_i32 : i32, i32
  }
  func.func @transform_1(%arg0: i32) -> (i32, i32) {
    %c0_i32 = arith.constant 0 : i32
    %c0_i32_0 = arith.constant 0 : i32
    %c0_i32_1 = arith.constant 0 : i32
    return %c0_i32, %c0_i32_0 : i32, i32
  }
  func.func @transform_2(%arg0: i32) -> (i32, i32) {
    %c0_i32 = arith.constant 0 : i32
    %c0_i32_0 = arith.constant 0 : i32
    %c0_i32_1 = arith.constant 0 : i32
    return %c0_i32, %c0_i32_0 : i32, i32
  }
  func.func @transform_3(%arg0: i32) -> (i32, i32) {
    %c0_i32 = arith.constant 0 : i32
    %c0_i32_0 = arith.constant 0 : i32
    return %arg0, %c0_i32 : i32, i32
  }
}

</mosaic_0001>

<llo_original>
// kernel: tpu_custom_call.1
$region0: #{tpu_custom_call.1}
  #allocation0 [shape = 'u32[]', space=smem, size = 0x4, offset = 0x4, fixed_abs, tag = 'smem constant byte address 0x4 - core index']
  #allocation1 [shape = 'u32[144,128]{1,0:T(1,128)}', space=vmem, size = 0x12000, scoped, tag = 'internal scratch']
  %s0 = inlined_call_operand.hbm [shape: f32[1,256], index: 0, kind: input, shape index: {}]
  %s1 = inlined_call_operand.hbm [shape: f32[256,384], index: 1, kind: input, shape index: {}]
  %s2 = inlined_call_operand.vmem [shape: f32[1,384], index: 2, kind: input, shape index: {}]
  %s3 = inlined_call_operand.hbm [shape: f32[1,384], index: 3, kind: output, shape index: {}]
  %s4 = sld [smem:[#allocation0]]
  $region30: #{tpu_custom_call.1} parent=0
    _
  %s6 = ssub.s32 1, %s4
  %s7 = scalar_select 0, %s6, %s4
  $region1: #{tpu_custom_call.1} parent=0
    #allocation2 [shape = 'u8[1024]{0}', space=vmem, size = 0x400, scoped, tag = 'input window, operand 0, single buffered']
    #allocation3 [shape = 's32[1]{0}', space=sflag, size = 0x4, scoped, tag = 'scoped memory for tpu_custom_call.1']
    #allocation4 [shape = 's32[1]{0}', space=sflag, size = 0x4, scoped, tag = 'scoped memory for tpu_custom_call.1']
    #allocation5 [shape = 'u8[393216]{0}', space=vmem, size = 0x60000, scoped, tag = 'input window, operand 1, single buffered']
    #allocation6 [shape = 's32[1]{0}', space=sflag, size = 0x4, scoped, tag = 'scoped memory for tpu_custom_call.1']
    #allocation7 [shape = 'u8[1536]{0}', space=vmem, size = 0x800, scoped, tag = 'output window, operand 0, single buffered']
    %8 = vsyncpa [#allocation3], 0
    %9 = vsyncpa [#allocation6], 0
    %10 = vsyncpa [#allocation4], 0
    // Predicated region
    $region2: #{tpu_custom_call.1} parent=1 // pred_check
      _
    $region3: #{tpu_custom_call.1} parent=1 // pred_check_branch
      %12 = sbr.rel (0) target = $region5
    $region4: #{tpu_custom_call.1} parent=1 // pred_region
      %s14 = ssub.s32 32, 32
      %15 = vsyncadd [#allocation3], %s14
      %s17 = sshll.u32 [#allocation2], 4
      %s18 = int_to_ptr.vmem [resolvable:$true] %s17
      %20 = dma.hbm_to_vmem [thread:$0]  %s0, 32, %s18, [#allocation3]
    $region5: #{tpu_custom_call.1} parent=1 // pred_fallthru
      _
    // Predicated region
    $region6: #{tpu_custom_call.1} parent=1 // pred_check
      _
    $region7: #{tpu_custom_call.1} parent=1 // pred_check_branch
      %22 = sbr.rel (0) target = $region9
    $region8: #{tpu_custom_call.1} parent=1 // pred_region
      %s24 = ssub.s32 12288, 12288
      %25 = vsyncadd [#allocation6], %s24
      %s26 = sshll.u32 [#allocation5], 4
      %s27 = int_to_ptr.vmem [resolvable:$true] %s26
      %32 = dma.hbm_to_vmem [thread:$0]  %s1, 12288, %s27, [#allocation6], 384, 384, 24
    $region9: #{tpu_custom_call.1} parent=1 // pred_fallthru
      _
    // Predicated region
    $region10: #{tpu_custom_call.1} parent=1 // pred_check
      _
    $region11: #{tpu_custom_call.1} parent=1 // pred_check_branch
      %34 = sbr.rel (0) target = $region13
    $region12: #{tpu_custom_call.1} parent=1 // pred_region
      _
    $region13: #{tpu_custom_call.1} parent=1 // pred_fallthru
      _
    // Predicated region
    $region14: #{tpu_custom_call.1} parent=1 // pred_check
      _
    $region15: #{tpu_custom_call.1} parent=1 // pred_check_branch
      %36 = sbr.rel (0) target = $region17
    $region16: #{tpu_custom_call.1} parent=1 // pred_region
      %37 = dma.done [#allocation3], 32
    $region17: #{tpu_custom_call.1} parent=1 // pred_fallthru
      _
    // Predicated region
    $region18: #{tpu_custom_call.1} parent=1 // pred_check
      _
    $region19: #{tpu_custom_call.1} parent=1 // pred_check_branch
      %39 = sbr.rel (0) target = $region21
    $region20: #{tpu_custom_call.1} parent=1 // pred_region
      %40 = dma.done [#allocation6], 12288
    $region21: #{tpu_custom_call.1} parent=1 // pred_fallthru
      _
    %v41 = vld [vmem:[#allocation2] sm:$0x3]
    %v42 = vld [vmem:[#allocation5] sm:$0xff]
    %v43 = vld [vmem:[#allocation5 + $0x8] sm:$0xff]
    %v44 = vld [vmem:[#allocation5 + $0x10] sm:$0xff]
    %v45 = vld [vmem:[#allocation5 + $0x18] sm:$0xff]
    %v46 = vld [vmem:[#allocation5 + $0x20] sm:$0xff]
    %v47 = vld [vmem:[#allocation5 + $0x28] sm:$0xff]
    %v48 = vld [vmem:[#allocation5 + $0x30] sm:$0xff]
    %v49 = vld [vmem:[#allocation5 + $0x38] sm:$0xff]
    %v50 = vld [vmem:[#allocation5 + $0x40] sm:$0xff]
    %v51 = vld [vmem:[#allocation5 + $0x48] sm:$0xff]
    %v52 = vld [vmem:[#allocation5 + $0x50] sm:$0xff]
    %v53 = vld [vmem:[#allocation5 + $0x58] sm:$0xff]
    %v54 = vld [vmem:[#allocation5 + $0x60] sm:$0xff]
    %v55 = vld [vmem:[#allocation5 + $0x68] sm:$0xff]
    %v56 = vld [vmem:[#allocation5 + $0x70] sm:$0xff]
    %v57 = vld [vmem:[#allocation5 + $0x78] sm:$0xff]
    %v58 = vld [vmem:[#allocation5 + $0x80] sm:$0xff]
    %v59 = vld [vmem:[#allocation5 + $0x88] sm:$0xff]
    %v60 = vld [vmem:[#allocation5 + $0x90] sm:$0xff]
    %v61 = vld [vmem:[#allocation5 + $0x98] sm:$0xff]
    %v62 = vld [vmem:[#allocation5 + $0xa0] sm:$0xff]
    %v63 = vld [vmem:[#allocation5 + $0xa8] sm:$0xff]
    %v64 = vld [vmem:[#allocation5 + $0xb0] sm:$0xff]
    %v65 = vld [vmem:[#allocation5 + $0xb8] sm:$0xff]
    %v66 = vld [vmem:[#allocation5 + $0xc0] sm:$0xff]
    %v67 = vld [vmem:[#allocation5 + $0xc8] sm:$0xff]
    %v68 = vld [vmem:[#allocation5 + $0xd0] sm:$0xff]
    %v69 = vld [vmem:[#allocation5 + $0xd8] sm:$0xff]
    %v70 = vld [vmem:[#allocation5 + $0xe0] sm:$0xff]
    %v71 = vld [vmem:[#allocation5 + $0xe8] sm:$0xff]
    %v72 = vld [vmem:[#allocation5 + $0xf0] sm:$0xff]
    %v73 = vld [vmem:[#allocation5 + $0xf8] sm:$0xff]
    %v74 = vld [vmem:[#allocation5 + $0x100] sm:$0xff]
    %v75 = vld [vmem:[#allocation5 + $0x108] sm:$0xff]
    %v76 = vld [vmem:[#allocation5 + $0x110] sm:$0xff]
    %v77 = vld [vmem:[#allocation5 + $0x118] sm:$0xff]
    %v78 = vld [vmem:[#allocation5 + $0x120] sm:$0xff]
    %v79 = vld [vmem:[#allocation5 + $0x128] sm:$0xff]
    %v80 = vld [vmem:[#allocation5 + $0x130] sm:$0xff]
    %v81 = vld [vmem:[#allocation5 + $0x138] sm:$0xff]
    %v82 = vld [vmem:[#allocation5 + $0x140] sm:$0xff]
    %v83 = vld [vmem:[#allocation5 + $0x148] sm:$0xff]
    %v84 = vld [vmem:[#allocation5 + $0x150] sm:$0xff]
    %v85 = vld [vmem:[#allocation5 + $0x158] sm:$0xff]
    %v86 = vld [vmem:[#allocation5 + $0x160] sm:$0xff]
    %v87 = vld [vmem:[#allocation5 + $0x168] sm:$0xff]
    %v88 = vld [vmem:[#allocation5 + $0x170] sm:$0xff]
    %v89 = vld [vmem:[#allocation5 + $0x178] sm:$0xff]
    %v90 = vld [vmem:[#allocation5 + $0x180] sm:$0xff]
    %v91 = vld [vmem:[#allocation5 + $0x188] sm:$0xff]
    %v92 = vld [vmem:[#allocation5 + $0x190] sm:$0xff]
    %v93 = vld [vmem:[#allocation5 + $0x198] sm:$0xff]
    %v94 = vld [vmem:[#allocation5 + $0x1a0] sm:$0xff]
    %v95 = vld [vmem:[#allocation5 + $0x1a8] sm:$0xff]
    %v96 = vld [vmem:[#allocation5 + $0x1b0] sm:$0xff]
    %v97 = vld [vmem:[#allocation5 + $0x1b8] sm:$0xff]
    %v98 = vld [vmem:[#allocation5 + $0x1c0] sm:$0xff]
    %v99 = vld [vmem:[#allocation5 + $0x1c8] sm:$0xff]
    %v100 = vld [vmem:[#allocation5 + $0x1d0] sm:$0xff]
    %v101 = vld [vmem:[#allocation5 + $0x1d8] sm:$0xff]
    %v102 = vld [vmem:[#allocation5 + $0x1e0] sm:$0xff]
    %v103 = vld [vmem:[#allocation5 + $0x1e8] sm:$0xff]
    %v104 = vld [vmem:[#allocation5 + $0x1f0] sm:$0xff]
    %v105 = vld [vmem:[#allocation5 + $0x1f8] sm:$0xff]
    %v106 = vld [vmem:[#allocation5 + $0x200] sm:$0xff]
    %v107 = vld [vmem:[#allocation5 + $0x208] sm:$0xff]
    %v108 = vld [vmem:[#allocation5 + $0x210] sm:$0xff]
    %v109 = vld [vmem:[#allocation5 + $0x218] sm:$0xff]
    %v110 = vld [vmem:[#allocation5 + $0x220] sm:$0xff]
    %v111 = vld [vmem:[#allocation5 + $0x228] sm:$0xff]
    %v112 = vld [vmem:[#allocation5 + $0x230] sm:$0xff]
    %v113 = vld [vmem:[#allocation5 + $0x238] sm:$0xff]
    %v114 = vld [vmem:[#allocation5 + $0x240] sm:$0xff]
    %v115 = vld [vmem:[#allocation5 + $0x248] sm:$0xff]
    %v116 = vld [vmem:[#allocation5 + $0x250] sm:$0xff]
    %v117 = vld [vmem:[#allocation5 + $0x258] sm:$0xff]
    %v118 = vld [vmem:[#allocation5 + $0x260] sm:$0xff]
    %v119 = vld [vmem:[#allocation5 + $0x268] sm:$0xff]
    %v120 = vld [vmem:[#allocation5 + $0x270] sm:$0xff]
    %v121 = vld [vmem:[#allocation5 + $0x278] sm:$0xff]
    %v122 = vld [vmem:[#allocation5 + $0x280] sm:$0xff]
    %v123 = vld [vmem:[#allocation5 + $0x288] sm:$0xff]
    %v124 = vld [vmem:[#allocation5 + $0x290] sm:$0xff]
    %v125 = vld [vmem:[#allocation5 + $0x298] sm:$0xff]
    %v126 = vld [vmem:[#allocation5 + $0x2a0] sm:$0xff]
    %v127 = vld [vmem:[#allocation5 + $0x2a8] sm:$0xff]
    %v128 = vld [vmem:[#allocation5 + $0x2b0] sm:$0xff]
    %v129 = vld [vmem:[#allocation5 + $0x2b8] sm:$0xff]
    %v130 = vld [vmem:[#allocation5 + $0x2c0] sm:$0xff]
    %v131 = vld [vmem:[#allocation5 + $0x2c8] sm:$0xff]
    %v132 = vld [vmem:[#allocation5 + $0x2d0] sm:$0xff]
    %v133 = vld [vmem:[#allocation5 + $0x2d8] sm:$0xff]
    %v134 = vld [vmem:[#allocation5 + $0x2e0] sm:$0xff]
    %v135 = vld [vmem:[#allocation5 + $0x2e8] sm:$0xff]
    %v136 = vld [vmem:[#allocation5 + $0x2f0] sm:$0xff]
    %v137 = vld [vmem:[#allocation5 + $0x2f8] sm:$0xff]
    %v138 = vld [vmem:[%s2] sm:$0x7]
    %v140 = vlaneseq
    %v141 = vshrl.u32 %v140, 7
    %v142 = vsub.s32 0, %v141
    %v143 = vrot.slane %v41, %v142
    %v144 = vlaneseq
    %v145 = vshrl.u32 %v144, 7
    %v146 = vsub.s32 1, %v145
    %v147 = vrot.slane %v41, %v146
    %v151 = vlaneseq
    %v152 = vshrl.u32 %v151, 7
    %v153 = vsub.s32 0, %v152
    %v154 = vrot.slane %v138, %v153
    %v155 = vlaneseq
    %v156 = vshrl.u32 %v155, 7
    %v157 = vsub.s32 1, %v156
    %v158 = vrot.slane %v138, %v157
    %v159 = vlaneseq
    %v160 = vshrl.u32 %v159, 7
    %v161 = vsub.s32 2, %v160
    %v162 = vrot.slane %v138, %v161
    %166 = vmatprep.subr.mxu0 %v88
    %167 = vmatpush1.msra.mxu0 %v87
    %168 = vmatprep.subr.mxu0 %v85
    %169 = vmatpush1.msra.mxu0 %v84
    %170 = vmatprep.subr.mxu0 %v82
    %171 = vmatpush1.msra.mxu0 %v81
    %172 = vmatprep.subr.mxu0 %v79
    %173 = vmatpush1.msra.mxu0 %v78
    %174 = vmatprep.subr.mxu0 %v76
    %175 = vmatpush1.msra.mxu0 %v75
    %176 = vmatprep.subr.mxu0 %v73
    %177 = vmatpush1.msra.mxu0 %v72
    %178 = vmatprep.subr.mxu0 %v70
    %179 = vmatpush1.msra.mxu0 %v69
    %180 = vmatprep.subr.mxu0 %v67
    %181 = vmatpush1.msra.mxu0 %v66
    %182 = vmatprep.subr.mxu0 %v64
    %183 = vmatpush1.msra.mxu0 %v63
    %184 = vmatprep.subr.mxu0 %v61
    %185 = vmatpush1.msra.mxu0 %v60
    %186 = vmatprep.subr.mxu0 %v58
    %187 = vmatpush1.msra.mxu0 %v57
    %188 = vmatprep.subr.mxu0 %v55
    %189 = vmatpush1.msra.mxu0 %v54
    %190 = vmatprep.subr.mxu0 %v52
    %191 = vmatpush1.msra.mxu0 %v51
    %192 = vmatprep.subr.mxu0 %v49
    %193 = vmatpush1.msra.mxu0 %v48
    %194 = vmatprep.subr.mxu0 %v46
    %195 = vmatpush1.msra.mxu0 %v45
    %196 = vmatprep.subr.mxu0 %v43
    %197 = vmatpush1.msra.mxu0 %v42
    %198 = vmatprep.subr.mxu0 %v136
    %199 = vmatpush2.msra.mxu0 %v135
    %200 = vmatprep.subr.mxu0 %v133
    %201 = vmatpush2.msra.mxu0 %v132
    %202 = vmatprep.subr.mxu0 %v130
    %203 = vmatpush2.msra.mxu0 %v129
    %204 = vmatprep.subr.mxu0 %v127
    %205 = vmatpush2.msra.mxu0 %v126
    %206 = vmatprep.subr.mxu0 %v124
    %207 = vmatpush2.msra.mxu0 %v123
    %208 = vmatprep.subr.mxu0 %v121
    %209 = vmatpush2.msra.mxu0 %v120
    %210 = vmatprep.subr.mxu0 %v118
    %211 = vmatpush2.msra.mxu0 %v117
    %212 = vmatprep.subr.mxu0 %v115
    %213 = vmatpush2.msra.mxu0 %v114
    %214 = vmatprep.subr.mxu0 %v112
    %215 = vmatpush2.msra.mxu0 %v111
    %216 = vmatprep.subr.mxu0 %v109
    %217 = vmatpush2.msra.mxu0 %v108
    %218 = vmatprep.subr.mxu0 %v106
    %219 = vmatpush2.msra.mxu0 %v105
    %220 = vmatprep.subr.mxu0 %v103
    %221 = vmatpush2.msra.mxu0 %v102
    %222 = vmatprep.subr.mxu0 %v100
    %223 = vmatpush2.msra.mxu0 %v99
    %224 = vmatprep.subr.mxu0 %v97
    %225 = vmatpush2.msra.mxu0 %v96
    %226 = vmatprep.subr.mxu0 %v94
    %227 = vmatpush2.msra.mxu0 %v93
    %228 = vmatprep.subr.mxu0 %v91
    %229 = vmatpush2.msra.mxu0 %v90
    %230 = vmatprep.mubr.f32.mxu0 %v147
    %231 = vmatmul.mubr.f32.gmra.mxu0 %v143
    %v232 = vpop.f32.mrf.mxu0
    %v233 = vadd.f32 %v154, %v232
    %v234 = vpop.f32.mrf.mxu0
    %v235 = vadd.f32 %v158, %v234
    %236 = vdwg.mxu0
    %237 = vmatprep.subr.mxu0 0.0
    %238 = vmatpush1.msra.mxu0 %v89
    %239 = vmatprep.subr.mxu0 0.0
    %240 = vmatpush1.msra.mxu0 %v86
    %241 = vmatprep.subr.mxu0 0.0
    %242 = vmatpush1.msra.mxu0 %v83
    %243 = vmatprep.subr.mxu0 0.0
    %244 = vmatpush1.msra.mxu0 %v80
    %245 = vmatprep.subr.mxu0 0.0
    %246 = vmatpush1.msra.mxu0 %v77
    %247 = vmatprep.subr.mxu0 0.0
    %248 = vmatpush1.msra.mxu0 %v74
    %249 = vmatprep.subr.mxu0 0.0
    %250 = vmatpush1.msra.mxu0 %v71
    %251 = vmatprep.subr.mxu0 0.0
    %252 = vmatpush1.msra.mxu0 %v68
    %253 = vmatprep.subr.mxu0 0.0
    %254 = vmatpush1.msra.mxu0 %v65
    %255 = vmatprep.subr.mxu0 0.0
    %256 = vmatpush1.msra.mxu0 %v62
    %257 = vmatprep.subr.mxu0 0.0
    %258 = vmatpush1.msra.mxu0 %v59
    %259 = vmatprep.subr.mxu0 0.0
    %260 = vmatpush1.msra.mxu0 %v56
    %261 = vmatprep.subr.mxu0 0.0
    %262 = vmatpush1.msra.mxu0 %v53
    %263 = vmatprep.subr.mxu0 0.0
    %264 = vmatpush1.msra.mxu0 %v50
    %265 = vmatprep.subr.mxu0 0.0
    %266 = vmatpush1.msra.mxu0 %v47
    %267 = vmatprep.subr.mxu0 0.0
    %268 = vmatpush1.msra.mxu0 %v44
    %269 = vmatprep.subr.mxu0 0.0
    %270 = vmatpush2.msra.mxu0 %v137
    %271 = vmatprep.subr.mxu0 0.0
    %272 = vmatpush2.msra.mxu0 %v134
    %273 = vmatprep.subr.mxu0 0.0
    %274 = vmatpush2.msra.mxu0 %v131
    %275 = vmatprep.subr.mxu0 0.0
    %276 = vmatpush2.msra.mxu0 %v128
    %277 = vmatprep.subr.mxu0 0.0
    %278 = vmatpush2.msra.mxu0 %v125
    %279 = vmatprep.subr.mxu0 0.0
    %280 = vmatpush2.msra.mxu0 %v122
    %281 = vmatprep.subr.mxu0 0.0
    %282 = vmatpush2.msra.mxu0 %v119
    %283 = vmatprep.subr.mxu0 0.0
    %284 = vmatpush2.msra.mxu0 %v116
    %285 = vmatprep.subr.mxu0 0.0
    %286 = vmatpush2.msra.mxu0 %v113
    %287 = vmatprep.subr.mxu0 0.0
    %288 = vmatpush2.msra.mxu0 %v110
    %289 = vmatprep.subr.mxu0 0.0
    %290 = vmatpush2.msra.mxu0 %v107
    %291 = vmatprep.subr.mxu0 0.0
    %292 = vmatpush2.msra.mxu0 %v104
    %293 = vmatprep.subr.mxu0 0.0
    %294 = vmatpush2.msra.mxu0 %v101
    %295 = vmatprep.subr.mxu0 0.0
    %296 = vmatpush2.msra.mxu0 %v98
    %297 = vmatprep.subr.mxu0 0.0
    %298 = vmatpush2.msra.mxu0 %v95
    %299 = vmatprep.subr.mxu0 0.0
    %300 = vmatpush2.msra.mxu0 %v92
    %301 = vmatprep.mubr.f32.mxu0 %v147
    %302 = vmatmul.mubr.f32.gmra.mxu0 %v143
    %v303 = vpop.f32.mrf.mxu0
    %v304 = vadd.f32 %v162, %v303
    %v305 = vpop.f32.mrf.mxu0
    %306 = vdwg.mxu0
    %v310 = vcombine.low %v233, %v235
    %v312 = vunpack.c.l.s4 1966171168
    %v313 = vunpack.c.0.s8 %v312
    %v314 = vlaneseq
    %v315 = vshrl.u32 %v314, 7
    %v316 = vsub.s32 %v313, %v315
    %v317 = vrot.slane %v310, %v316
    %v319 = vunpack.c.l.s4 1966171168
    %v320 = vunpack.c.0.s8 %v319
    %v321 = vlaneseq
    %v322 = vshrl.u32 %v321, 7
    %v323 = vsub.s32 %v320, %v322
    %v324 = vrot.slane %v304, %v323
    %v325 = vcombine.low %v317, %v324
    %v327 = vunpack.c.l.s4 1966171168
    %v328 = vunpack.c.0.s8 %v327
    %v329 = vlaneseq
    %v330 = vshrl.u32 %v329, 7
    %v331 = vsub.s32 %v328, %v330
    %v332 = vrot.slane %v325, %v331
    %v334 = vlaneseq
    %vm335 = vcmp.ge.s32.totalorder %v334, 0
    %vm336 = vcmp.lt.s32.totalorder %v334, 384
    %vm337 = vmand %vm335, %vm336
    %338 = vst.msk [vmem:[#allocation7] sm:$0x7] %vm337, %v332
    // Predicated region
    $region22: #{tpu_custom_call.1} parent=1 // pred_check
      _
    $region23: #{tpu_custom_call.1} parent=1 // pred_check_branch
      %340 = sbr.rel (0) target = $region25
    $region24: #{tpu_custom_call.1} parent=1 // pred_region
      %s342 = ssub.s32 48, 48
      %343 = vsyncadd [#allocation4], %s342
      %s345 = sshll.u32 [#allocation7], 4
      %s346 = int_to_ptr.vmem [resolvable:$true] %s345
      %348 = dma.vmem_to_hbm [thread:$0]  %s346, 48, %s3, [#allocation4]
    $region25: #{tpu_custom_call.1} parent=1 // pred_fallthru
      _
    // Predicated region
    $region26: #{tpu_custom_call.1} parent=1 // pred_check
      _
    $region27: #{tpu_custom_call.1} parent=1 // pred_check_branch
      %350 = sbr.rel (0) target = $region29
    $region28: #{tpu_custom_call.1} parent=1 // pred_region
      %351 = dma.done [#allocation4], 48
    $region29: #{tpu_custom_call.1} parent=1 // pred_fallthru
      _
    %352 = vsyncpa [#allocation3], 1
    %353 = vsyncpa [#allocation6], 1
    %354 = vsyncpa [#allocation4], 1

</llo_original>
